<compile_context>
chip_gen: v5e
topology: v5e:2x2
jax: 0.10.0
libtpu: 0.0.40
codegen_flags: <defaults>
</compile_context>

<pallas_src>
import jax
import jax.numpy as jnp
from jax.experimental import pallas as pl
from jax.experimental.pallas import tpu as pltpu

_LANE = 128
_VMEM_BUDGET_BYTES = 24 * 1024 * 1024   # target double-buffered VMEM residency
_VMEM_LIMIT_BYTES = 32 * 1024 * 1024    # explicit scoped-VMEM limit (v7x-safe)
_MIN_PALLAS_BYTES = 256 * 1024          # per-batch feature bytes below which XLA wins


def _make_kernel(rc: int, c_total: int, uncertain: bool, feat_dtype):
    """Kernel over one (batch, spatial-tile) block.

    feat_ref: (4*rc, T)  -- first 4*rc channels of the feature
    unc_ref : (4, T)
    out_ref : (C, T)     -- full channel extent (tail zeroed in-kernel)
    """
    c4 = 4 * rc

    def kernel(feat_ref, unc_ref, out_ref):
        t = out_ref.shape[1]
        u = unc_ref[...]                      # (4, T)
        if not uncertain:
            u = 1.0 - u                       # complement computed once per tile
        u = u.astype(feat_dtype)              # avoid f32 widening on bf16 paths
        for g in range(4):
            prod = feat_ref[g * rc:(g + 1) * rc, :] * u[g:g + 1, :]
            out_ref[g * rc:(g + 1) * rc, :] = prod.astype(out_ref.dtype)
        if c_total > c4:
            # Constant zero channel tail written directly from the kernel
            # (cheaper than a wrapper-side concatenate over the whole result).
            out_ref[c4:, :] = jnp.zeros((c_total - c4, t), out_ref.dtype)

    return kernel


def _choose_tile(hw: int, n_other_steps: int, bytes_per_lane: int) -> int:
    """Pick the spatial (lane) tile size.

    Either a multiple of 128 (ragged last block is masked on writeback) or exactly
    `hw` (full-extent block), bounded by the double-buffered VMEM budget, and small
    enough that the grid has >= 4 total steps so both v7x TensorCores are used.
    """
    budget_lanes = max(_LANE, (_VMEM_BUDGET_BYTES // bytes_per_lane) // _LANE * _LANE)

    if hw <= _LANE:
        return hw                                   # single tiny full-extent block
    if hw % _LANE == 0:
        t_hw = min(hw, budget_lanes)
    elif hw <= budget_lanes and n_other_steps >= 4:
        t_hw = hw                                   # exact full-extent block, no ragged tile
    else:
        t_hw = min(budget_lanes, (hw // _LANE) * _LANE)   # 128-multiple, ragged last block

    # Megacore: guarantee >= 4 grid steps so dimension_semantics=("parallel","parallel")
    # actually shards work across both v7x TensorCores (no-op on v5e/v6e).
    while (n_other_steps * pl.cdiv(hw, t_hw) < 4
           and t_hw >= 2 * _LANE and t_hw % _LANE == 0):
        t_hw = -(-(t_hw // 2) // _LANE) * _LANE
    return t_hw


def _plain_jax_forward(feature, uncertainties, rc: int, uncertain: bool):
    """Fused-XLA fallback for tiny levels / unsupported channel layouts."""
    N, C, H, W = feature.shape
    c4 = 4 * rc
    u = uncertainties if uncertain else 1.0 - uncertainties
    u = u.astype(feature.dtype)                                   # (N, 4, H, W)
    scaled = (feature[:, :c4].reshape(N, 4, rc, H, W) * u[:, :, None, :, :]
              ).reshape(N, c4, H, W)
    if C == c4:
        return scaled
    return jnp.concatenate(
        [scaled, jnp.zeros((N, C - c4, H, W), feature.dtype)], axis=1)


def uncertainty_attentive(feature, uncertainties, *, refeat_channel, uncertain,
                          force_pallas=False):
    """feature: (N, C, H, W); uncertainties: (N, 4, H, W).  Returns (N, C, H, W)."""
    N, C, H, W = feature.shape
    rc = int(refeat_channel)
    c4 = 4 * rc
    if uncertainties.shape != (N, 4, H, W):
        raise ValueError(
            f"uncertainties must have shape {(N, 4, H, W)}, got {uncertainties.shape}")
    if C < c4:
        raise ValueError(f"C={C} must be >= 4*refeat_channel={c4}")

    HW = H * W
    feat_itemsize = jnp.dtype(feature.dtype).itemsize
    unc_itemsize = jnp.dtype(uncertainties.dtype).itemsize

    # (8,128) rule for the feature BlockSpec: second-to-last block dim (c4) must be a
    # multiple of 8 or equal to the full channel extent.
    blockable = (c4 % 8 == 0) or (c4 == C)
    tiny = c4 * HW * feat_itemsize < _MIN_PALLAS_BYTES
    # Double-buffered bytes per lane column: feat-in (c4) + out (C) + unc-in (4).
    bytes_per_lane = 2 * ((c4 + C) * feat_itemsize + 4 * unc_itemsize)
    fits = bytes_per_lane * _LANE <= _VMEM_LIMIT_BYTES

    if (not blockable) or (not fits) or (tiny and not force_pallas):
        return _plain_jax_forward(feature, uncertainties, rc, uncertain)

    # Free reshapes of contiguous NCHW tensors; no slicing/padding copies.
    feat2 = feature.reshape(N, C, HW)
    unc2 = uncertainties.reshape(N, 4, HW)

    t_hw = _choose_tile(HW, N, bytes_per_lane)
    num_tiles = pl.cdiv(HW, t_hw)

    kernel = _make_kernel(rc, C, uncertain, feature.dtype)

    out2 = pl.pallas_call(
        kernel,
        out_shape=jax.ShapeDtypeStruct((N, C, HW), feature.dtype),
        grid=(N, num_tiles),
        in_specs=[
            # Only the first 4*rc channels of the full feature are ever DMA'd.
            pl.BlockSpec((None, c4, t_hw), lambda n, t: (n, 0, t)),
            pl.BlockSpec((None, 4, t_hw), lambda n, t: (n, 0, t)),
        ],
        # Full channel extent so the final output (incl. zero tail) comes straight
        # out of the pallas_call.
        out_specs=pl.BlockSpec((None, C, t_hw), lambda n, t: (n, 0, t)),
        compiler_params=pltpu.CompilerParams(
            dimension_semantics=("parallel", "parallel"),
            vmem_limit_bytes=_VMEM_LIMIT_BYTES,
        ),
    )(feat2, unc2)

    return out2.reshape(N, C, H, W)


def _reference(feature, uncertainties, *, refeat_channel, uncertain):
    """Plain-JAX reference mirroring the PyTorch forward."""
    rc = refeat_channel
    u = uncertainties if uncertain else 1.0 - uncertainties
    out = jnp.zeros_like(feature)
    for g in range(4):
        out = out.at[:, g * rc:(g + 1) * rc, :, :].set(
            feature[:, g * rc:(g + 1) * rc, :, :] * u[:, g:g + 1, :, :])
    return out


if __name__ == "__main__":
    key = jax.random.PRNGKey(0)
    k1, k2, k3, k4 = jax.random.split(key, 4)

    # Case 1: Uncertain=True, rc=8, C == 4*rc, 128-aligned spatial (HW=256).
    N, rc, H, W = 2, 8, 16, 16
    C = 4 * rc
    feature = jax.random.normal(k1, (N, C, H, W), dtype=jnp.float32)
    uncertainties = jax.random.uniform(k2, (N, 4, H, W), dtype=jnp.float32)

    out = uncertainty_attentive(
        feature, uncertainties, refeat_channel=rc, uncertain=True, force_pallas=True)
    out = jax.block_until_ready(out)
    ref = _reference(feature, uncertainties, refeat_channel=rc, uncertain=True)
    assert out.shape == (N, C, H, W)
    assert jnp.allclose(out, ref, atol=1e-6, rtol=1e-6)

    # Case 2: Uncertain=False, extra channel tail (C > 4*rc) zeroed in-kernel,
    # non-128 spatial (13x13) -> ragged last block with masked writeback.
    C2, H2, W2 = 4 * rc + 4, 13, 13
    feature2 = jax.random.normal(k3, (N, C2, H2, W2), dtype=jnp.float32)
    uncertainties2 = jax.random.uniform(k4, (N, 4, H2, W2), dtype=jnp.float32)

    out2 = uncertainty_attentive(
        feature2, uncertainties2, refeat_channel=rc, uncertain=False, force_pallas=True)
    out2 = jax.block_until_ready(out2)
    ref2 = _reference(feature2, uncertainties2, refeat_channel=rc, uncertain=False)
    assert out2.shape == (N, C2, H2, W2)
    assert jnp.allclose(out2, ref2, atol=1e-6, rtol=1e-6)

    # Case 3: tiny-level dispatch falls back to the fused-XLA path; must match too.
    out3 = uncertainty_attentive(
        feature2, uncertainties2, refeat_channel=rc, uncertain=False)
    out3 = jax.block_until_ready(out3)
    assert jnp.allclose(out3, ref2, atol=1e-6, rtol=1e-6)

    print("KERNEL_OK")
</pallas_src>

<mosaic_0001>
module attributes {stable_mosaic.version = 11 : i64} {
  func.func @kernel(%arg0: i32, %arg1: i32, %arg2: memref<1x32x128xf32, #tpu.memory_space<vmem>>, %arg3: memref<1x4x128xf32, #tpu.memory_space<vmem>>, %arg4: memref<1x32x128xf32, #tpu.memory_space<vmem>>) attributes {dimension_semantics = [#tpu.dimension_semantics<parallel>, #tpu.dimension_semantics<parallel>], iteration_bounds = array<i64: 2, 2>, scalar_prefetch = 0 : i64, scratch_operands = 0 : i64, tpu.core_type = #tpu.core_type<tc>, window_params = [{transform_indices = @transform_0, window_bounds = array<i64: 1, 32, 128>}, {transform_indices = @transform_1, window_bounds = array<i64: 1, 4, 128>}, {transform_indices = @transform_2, window_bounds = array<i64: 1, 32, 128>}]} {
    %c0 = arith.constant 0 : index
    %c0_0 = arith.constant 0 : index
    %c0_1 = arith.constant 0 : index
    %0 = vector.load %arg3[%c0, %c0_0, %c0_1] : memref<1x4x128xf32, #tpu.memory_space<vmem>>, vector<1x4x128xf32>
    %1 = vector.shape_cast %0 : vector<1x4x128xf32> to vector<4x128xf32>
    %c0_2 = arith.constant 0 : index
    %c0_3 = arith.constant 0 : index
    %c0_4 = arith.constant 0 : index
    %2 = vector.load %arg2[%c0_2, %c0_3, %c0_4] : memref<1x32x128xf32, #tpu.memory_space<vmem>>, vector<1x8x128xf32>
    %3 = vector.shape_cast %2 : vector<1x8x128xf32> to vector<8x128xf32>
    %4 = vector.extract_strided_slice %1 {offsets = [0, 0], sizes = [1, 128], strides = [1, 1]} : vector<4x128xf32> to vector<1x128xf32>
    %5 = vector.broadcast %4 : vector<1x128xf32> to vector<8x128xf32>
    %6 = arith.mulf %3, %5 : vector<8x128xf32>
    %c0_5 = arith.constant 0 : index
    %c0_6 = arith.constant 0 : index
    %c0_7 = arith.constant 0 : index
    %7 = vector.load %arg4[%c0_5, %c0_6, %c0_7] : memref<1x32x128xf32, #tpu.memory_space<vmem>>, vector<1x8x128xf32>
    %8 = vector.shape_cast %7 : vector<1x8x128xf32> to vector<8x128xf32>
    %9 = vector.shape_cast %6 : vector<8x128xf32> to vector<1x8x128xf32>
    tpu.vector_store %arg4[%c0_5, %c0_6, %c0_7], %9 {strides = array<i32>} : memref<1x32x128xf32, #tpu.memory_space<vmem>>, vector<1x8x128xf32>,
    %c0_8 = arith.constant 0 : index
    %c8 = arith.constant 8 : index
    %c0_9 = arith.constant 0 : index
    %10 = vector.load %arg2[%c0_8, %c8, %c0_9] : memref<1x32x128xf32, #tpu.memory_space<vmem>>, vector<1x8x128xf32>
    %11 = vector.shape_cast %10 : vector<1x8x128xf32> to vector<8x128xf32>
    %12 = vector.extract_strided_slice %1 {offsets = [1, 0], sizes = [1, 128], strides = [1, 1]} : vector<4x128xf32> to vector<1x128xf32>
    %13 = vector.broadcast %12 : vector<1x128xf32> to vector<8x128xf32>
    %14 = arith.mulf %11, %13 : vector<8x128xf32>
    %c0_10 = arith.constant 0 : index
    %c8_11 = arith.constant 8 : index
    %c0_12 = arith.constant 0 : index
    %15 = vector.load %arg4[%c0_10, %c8_11, %c0_12] : memref<1x32x128xf32, #tpu.memory_space<vmem>>, vector<1x8x128xf32>
    %16 = vector.shape_cast %15 : vector<1x8x128xf32> to vector<8x128xf32>
    %17 = vector.shape_cast %14 : vector<8x128xf32> to vector<1x8x128xf32>
    tpu.vector_store %arg4[%c0_10, %c8_11, %c0_12], %17 {strides = array<i32>} : memref<1x32x128xf32, #tpu.memory_space<vmem>>, vector<1x8x128xf32>,
    %c0_13 = arith.constant 0 : index
    %c16 = arith.constant 16 : index
    %c0_14 = arith.constant 0 : index
    %18 = vector.load %arg2[%c0_13, %c16, %c0_14] : memref<1x32x128xf32, #tpu.memory_space<vmem>>, vector<1x8x128xf32>
    %19 = vector.shape_cast %18 : vector<1x8x128xf32> to vector<8x128xf32>
    %20 = vector.extract_strided_slice %1 {offsets = [2, 0], sizes = [1, 128], strides = [1, 1]} : vector<4x128xf32> to vector<1x128xf32>
    %21 = vector.broadcast %20 : vector<1x128xf32> to vector<8x128xf32>
    %22 = arith.mulf %19, %21 : vector<8x128xf32>
    %c0_15 = arith.constant 0 : index
    %c16_16 = arith.constant 16 : index
    %c0_17 = arith.constant 0 : index
    %23 = vector.load %arg4[%c0_15, %c16_16, %c0_17] : memref<1x32x128xf32, #tpu.memory_space<vmem>>, vector<1x8x128xf32>
    %24 = vector.shape_cast %23 : vector<1x8x128xf32> to vector<8x128xf32>
    %25 = vector.shape_cast %22 : vector<8x128xf32> to vector<1x8x128xf32>
    tpu.vector_store %arg4[%c0_15, %c16_16, %c0_17], %25 {strides = array<i32>} : memref<1x32x128xf32, #tpu.memory_space<vmem>>, vector<1x8x128xf32>,
    %c0_18 = arith.constant 0 : index
    %c24 = arith.constant 24 : index
    %c0_19 = arith.constant 0 : index
    %26 = vector.load %arg2[%c0_18, %c24, %c0_19] : memref<1x32x128xf32, #tpu.memory_space<vmem>>, vector<1x8x128xf32>
    %27 = vector.shape_cast %26 : vector<1x8x128xf32> to vector<8x128xf32>
    %28 = vector.extract_strided_slice %1 {offsets = [3, 0], sizes = [1, 128], strides = [1, 1]} : vector<4x128xf32> to vector<1x128xf32>
    %29 = vector.broadcast %28 : vector<1x128xf32> to vector<8x128xf32>
    %30 = arith.mulf %27, %29 : vector<8x128xf32>
    %c0_20 = arith.constant 0 : index
    %c24_21 = arith.constant 24 : index
    %c0_22 = arith.constant 0 : index
    %31 = vector.load %arg4[%c0_20, %c24_21, %c0_22] : memref<1x32x128xf32, #tpu.memory_space<vmem>>, vector<1x8x128xf32>
    %32 = vector.shape_cast %31 : vector<1x8x128xf32> to vector<8x128xf32>
    %33 = vector.shape_cast %30 : vector<8x128xf32> to vector<1x8x128xf32>
    tpu.vector_store %arg4[%c0_20, %c24_21, %c0_22], %33 {strides = array<i32>} : memref<1x32x128xf32, #tpu.memory_space<vmem>>, vector<1x8x128xf32>,
    return
  }
  func.func @transform_0(%arg0: i32, %arg1: i32) -> (i32, i32, i32) {
    %c0_i32 = arith.constant 0 : i32
    %c0_i32_0 = arith.constant 0 : i32
    return %arg0, %c0_i32, %arg1 : i32, i32, i32
  }
  func.func @transform_1(%arg0: i32, %arg1: i32) -> (i32, i32, i32) {
    %c0_i32 = arith.constant 0 : i32
    %c0_i32_0 = arith.constant 0 : i32
    return %arg0, %c0_i32, %arg1 : i32, i32, i32
  }
  func.func @transform_2(%arg0: i32, %arg1: i32) -> (i32, i32, i32) {
    %c0_i32 = arith.constant 0 : i32
    %c0_i32_0 = arith.constant 0 : i32
    return %arg0, %c0_i32, %arg1 : i32, i32, i32
  }
}

</mosaic_0001>

<llo_original>
// kernel: tpu_custom_call.1
$region0: #{tpu_custom_call.1}
  #allocation0 [shape = 'u32[]', space=smem, size = 0x4, offset = 0x4, fixed_abs, tag = 'smem constant byte address 0x4 - core index']
  #allocation1 [shape = 'u32[72,128]{1,0:T(1,128)}', space=vmem, size = 0x9000, scoped, tag = 'internal scratch']
  %s0 = inlined_call_operand.hbm [shape: f32[2,32,256], index: 0, kind: input, shape index: {}]
  %s1 = inlined_call_operand.hbm [shape: f32[2,4,256], index: 1, kind: input, shape index: {}]
  %s2 = inlined_call_operand.hbm [shape: f32[2,32,256], index: 2, kind: output, shape index: {}]
  %s3 = sld [smem:[#allocation0]]
  $region49: #{tpu_custom_call.1} parent=0
    _
  %s5 = ssub.s32 1, %s3
  %s6 = scalar_select 0, %s5, %s3
  $region1: #{tpu_custom_call.1} parent=0
    #allocation2 [shape = 'u8[32768]{0}', space=vmem, size = 0x8000, scoped, tag = 'input window, operand 0']
    #allocation3 [shape = 's32[2]{0}', space=sflag, size = 0x8, scoped, tag = 'scoped memory for tpu_custom_call.1']
    #allocation4 [shape = 's32[2]{0}', space=sflag, size = 0x8, scoped, tag = 'scoped memory for tpu_custom_call.1']
    #allocation5 [shape = 'u8[4096]{0}', space=vmem, size = 0x1000, scoped, tag = 'input window, operand 1']
    #allocation6 [shape = 's32[2]{0}', space=sflag, size = 0x8, scoped, tag = 'scoped memory for tpu_custom_call.1']
    #allocation7 [shape = 'u8[32768]{0}', space=vmem, size = 0x8000, scoped, tag = 'output window, operand 0']
    %7 = vsyncpa [#allocation3], 0
    %s8 = scalar_lea.sflag [#allocation3], 1
    %9 = vsyncpa %s8, 0
    %10 = vsyncpa [#allocation6], 0
    %s11 = scalar_lea.sflag [#allocation6], 1
    %12 = vsyncpa %s11, 0
    %13 = vsyncpa [#allocation4], 0
    %s14 = scalar_lea.sflag [#allocation4], 1
    %15 = vsyncpa %s14, 0
    loop: start=0, step=1, limit=6
    $region2: #{tpu_custom_call.1} parent=1 // loop_pre_header
      _
    $region3: #{tpu_custom_call.1} parent=1 // loop_header
      %s17 = sphi 0, %s21
      %p18 = scmp.ge.s32.totalorder %s17, 6
      %s24 = sphi 0, %s36
      %s25 = sphi 0, %s32
      %s26 = sphi 0, %s24
      %s27 = sphi 0, %s25
      %s28 = sphi 0, %s26
      %s29 = sphi 0, %s27
      %s41 = sphi 0, %s43
      %s44 = sphi 0, %s41
      %s45 = sphi 0, %s44
      %s61 = sphi 0, %s45
      %s69 = sphi 0, %s71
      %s72 = sphi 0, %s69
      %s73 = sphi 0, %s72
      %s89 = sphi 0, %s73
      %s97 = sphi 0, %s99
      %s100 = sphi 0, %s97
      %s101 = sphi 0, %s100
      %s117 = sphi 0, %s101
    $region4: #{tpu_custom_call.1} parent=1 // loop_header_branch
      %20 = sbr.rel (%p18) target = $region8
    $region5: #{tpu_custom_call.1} parent=1 // loop_body
      %s22 = ssub.s32 %s17, 1
      %s23 = ssub.s32 %s17, 2
      %s30 = sadd.s32 1, %s25
      %p31 = scmp.ge.s32.totalorder %s30, 2
      %s32 = scalar_select %p31, 0, %s30
      %s33 = sadd.s32 1, %s24
      %s34 = scalar_select %p31, %s33, %s24
      %p35 = scmp.ge.s32.totalorder %s34, 2
      %s36 = scalar_select %p35, 0, %s34
      %s37 = ssub.s32 %s24, %s36
      %s38 = ssub.s32 %s25, %s32
      %s39 = sor.u32 %s37, %s38
      %p40 = scmp.eq.s32.totalorder %s39, 0
      %s42 = sadd.s32 %s41, 1
      %s43 = scalar_select %p40, %s41, %s42
      %p46 = pneg %p40
      %p47 = scmp.eq.s32.totalorder %s17, 3
      %p48 = por %p46, %p47
      %p49 = scmp.ne.s32.totalorder %s41, %s44
      %p50 = scmp.eq.s32.totalorder %s17, 0
      %p51 = por %p49, %p50
      %p52 = scmp.ne.s32.totalorder %s41, %s44
      %p53 = scmp.eq.s32.totalorder %s22, 3
      %p54 = por %p52, %p53
      %p55 = scmp.ne.s32.totalorder %s44, %s45
      %p56 = scmp.eq.s32.totalorder %s22, 0
      %p57 = por %p55, %p56
      %p58 = scmp.ne.s32.totalorder %s44, %s45
      %p59 = scmp.eq.s32.totalorder %s23, 3
      %p60 = por %p58, %p59
      %p62 = scmp.ne.s32.totalorder %s45, %s61
      %p63 = scmp.eq.s32.totalorder %s23, 0
      %p64 = por %p62, %p63
      %s65 = ssub.s32 %s24, %s36
      %s66 = ssub.s32 %s25, %s32
      %s67 = sor.u32 %s65, %s66
      %p68 = scmp.eq.s32.totalorder %s67, 0
      %s70 = sadd.s32 %s69, 1
      %s71 = scalar_select %p68, %s69, %s70
      %p74 = pneg %p68
      %p75 = scmp.eq.s32.totalorder %s17, 3
      %p76 = por %p74, %p75
      %p77 = scmp.ne.s32.totalorder %s69, %s72
      %p78 = scmp.eq.s32.totalorder %s17, 0
      %p79 = por %p77, %p78
      %p80 = scmp.ne.s32.totalorder %s69, %s72
      %p81 = scmp.eq.s32.totalorder %s22, 3
      %p82 = por %p80, %p81
      %p83 = scmp.ne.s32.totalorder %s72, %s73
      %p84 = scmp.eq.s32.totalorder %s22, 0
      %p85 = por %p83, %p84
      %p86 = scmp.ne.s32.totalorder %s72, %s73
      %p87 = scmp.eq.s32.totalorder %s23, 3
      %p88 = por %p86, %p87
      %p90 = scmp.ne.s32.totalorder %s73, %s89
      %p91 = scmp.eq.s32.totalorder %s23, 0
      %p92 = por %p90, %p91
      %s93 = ssub.s32 %s24, %s36
      %s94 = ssub.s32 %s25, %s32
      %s95 = sor.u32 %s93, %s94
      %p96 = scmp.eq.s32.totalorder %s95, 0
      %s98 = sadd.s32 %s97, 1
      %s99 = scalar_select %p96, %s97, %s98
      %p102 = pneg %p96
      %p103 = scmp.eq.s32.totalorder %s17, 3
      %p104 = por %p102, %p103
      %p105 = scmp.ne.s32.totalorder %s97, %s100
      %p106 = scmp.eq.s32.totalorder %s17, 0
      %p107 = por %p105, %p106
      %p108 = scmp.ne.s32.totalorder %s97, %s100
      %p109 = scmp.eq.s32.totalorder %s22, 3
      %p110 = por %p108, %p109
      %p111 = scmp.ne.s32.totalorder %s100, %s101
      %p112 = scmp.eq.s32.totalorder %s22, 0
      %p113 = por %p111, %p112
      %p114 = scmp.ne.s32.totalorder %s100, %s101
      %p115 = scmp.eq.s32.totalorder %s23, 3
      %p116 = por %p114, %p115
      %p118 = scmp.ne.s32.totalorder %s101, %s117
      %p119 = scmp.eq.s32.totalorder %s23, 0
      %p120 = por %p118, %p119
      %p121 = scmp.le.s32.totalorder 1, %s17
      %p122 = scmp.lt.s32.totalorder %s17, 5
      %p123 = pnand %p121, %p122
      %p124 = pneg %p123
      // Predicated region
      $region9: #{tpu_custom_call.1} parent=5 // pred_check
        _
      $region10: #{tpu_custom_call.1} parent=5 // pred_check_branch
        %126 = sbr.rel (%p123) target = $region12
      $region11: #{tpu_custom_call.1} parent=5 // pred_region
        %s127 = ssub.s32 %s17, 1
      $region12: #{tpu_custom_call.1} parent=5 // pred_fallthru
        _
      %p128 = scmp.lt.s32.totalorder %s17, 4
      // Predicated region
      $region13: #{tpu_custom_call.1} parent=5 // pred_check
        %p129 = pneg %p128
      $region14: #{tpu_custom_call.1} parent=5 // pred_check_branch
        %131 = sbr.rel (%p129) target = $region16
      $region15: #{tpu_custom_call.1} parent=5 // pred_region
        // Predicated region
        $region17: #{tpu_custom_call.1} parent=15 // pred_check
          %p132 = pneg %p51
        $region18: #{tpu_custom_call.1} parent=15 // pred_check_branch
          %134 = sbr.rel (%p132) target = $region20
        $region19: #{tpu_custom_call.1} parent=15 // pred_region
          %s135 = sand.u32 %s41, 1
          %s136 = scalar_lea.sflag [#allocation3], %s135
          %s137 = sand.u32 %s41, 1
          %s138 = smul.addr %s137, 32
          %s139 = scalar_lea.vmem [#allocation2], %s138
          %141 = vsyncadd %s136, 0
          %s142 = smul.addr %s24, 8
          %s143 = sadd.s32 %s25, %s142
          %s144 = smul.addr %s143, 8
          %s145 = scalar_lea.hbm %s0, %s144
          %s146 = sshll.u32 %s145, 4
          %s147 = int_to_ptr.hbm [resolvable:$true] %s146
          %s148 = sshll.u32 %s139, 4
          %s149 = int_to_ptr.vmem [resolvable:$true] %s148
          %154 = dma.hbm_to_vmem [thread:$0]  %s147, 512, %s149, %s136, 256, 128, 8
        $region20: #{tpu_custom_call.1} parent=15 // pred_fallthru
          _
        // Predicated region
        $region21: #{tpu_custom_call.1} parent=15 // pred_check
          %p155 = pneg %p79
        $region22: #{tpu_custom_call.1} parent=15 // pred_check_branch
          %157 = sbr.rel (%p155) target = $region24
        $region23: #{tpu_custom_call.1} parent=15 // pred_region
          %s158 = sand.u32 %s69, 1
          %s159 = scalar_lea.sflag [#allocation6], %s158
          %s160 = sand.u32 %s69, 1
          %s161 = smul.addr %s160, 4
          %s162 = scalar_lea.vmem [#allocation5], %s161
          %164 = vsyncadd %s159, 0
          %s165 = smul.addr %s24, 2
          %s166 = sadd.s32 %s25, %s165
          %s167 = smul.addr %s166, 4
          %s168 = scalar_lea.hbm %s1, %s167
          %s170 = sshll.u32 %s168, 4
          %s171 = int_to_ptr.hbm [resolvable:$true] %s170
          %s172 = sshll.u32 %s162, 4
          %s173 = int_to_ptr.vmem [resolvable:$true] %s172
          %175 = dma.hbm_to_vmem [thread:$0]  %s171, 64, %s173, %s159
        $region24: #{tpu_custom_call.1} parent=15 // pred_fallthru
          _
      $region16: #{tpu_custom_call.1} parent=5 // pred_fallthru
        _
      %p176 = scmp.le.s32.totalorder 1, %s17
      %p177 = scmp.lt.s32.totalorder %s17, 5
      %p178 = pnand %p176, %p177
      %p179 = pneg %p178
      // Predicated region
      $region25: #{tpu_custom_call.1} parent=5 // pred_check
        _
      $region26: #{tpu_custom_call.1} parent=5 // pred_check_branch
        %181 = sbr.rel (%p178) target = $region28
      $region27: #{tpu_custom_call.1} parent=5 // pred_region
        %s182 = ssub.s32 %s17, 1
        %s183 = sand.u32 %s44, 1
        %s184 = scalar_lea.sflag [#allocation3], %s183
        %s185 = sand.u32 %s44, 1
        %s186 = smul.addr %s185, 32
        %s187 = scalar_lea.vmem [#allocation2], %s186
        // Predicated region
        $region29: #{tpu_custom_call.1} parent=27 // pred_check
          %p188 = pneg %p57
        $region30: #{tpu_custom_call.1} parent=27 // pred_check_branch
          %190 = sbr.rel (%p188) target = $region32
        $region31: #{tpu_custom_call.1} parent=27 // pred_region
          %192 = dma.done %s184, 512
        $region32: #{tpu_custom_call.1} parent=27 // pred_fallthru
          _
        %s193 = sand.u32 %s72, 1
        %s194 = scalar_lea.sflag [#allocation6], %s193
        %s195 = sand.u32 %s72, 1
        %s196 = smul.addr %s195, 4
        %s197 = scalar_lea.vmem [#allocation5], %s196
        // Predicated region
        $region33: #{tpu_custom_call.1} parent=27 // pred_check
          %p198 = pneg %p85
        $region34: #{tpu_custom_call.1} parent=27 // pred_check_branch
          %200 = sbr.rel (%p198) target = $region36
        $region35: #{tpu_custom_call.1} parent=27 // pred_region
          %202 = dma.done %s194, 64
        $region36: #{tpu_custom_call.1} parent=27 // pred_fallthru
          _
        %s203 = sand.u32 %s44, 1
        %s204 = scalar_lea.sflag [#allocation3], %s203
        %s205 = sand.u32 %s44, 1
        %s206 = smul.addr %s205, 32
        %s207 = scalar_lea.vmem [#allocation2], %s206
        %p208 = pneg %p57
        %p209 = pneg %p54
        %s210 = sand.u32 %s72, 1
        %s211 = scalar_lea.sflag [#allocation6], %s210
        %s212 = sand.u32 %s72, 1
        %s213 = smul.addr %s212, 4
        %s214 = scalar_lea.vmem [#allocation5], %s213
        %p215 = pneg %p85
        %p216 = pneg %p82
        %p217 = pneg %p113
        %p218 = pneg %p110
        %s219 = sand.u32 %s100, 1
        %s220 = scalar_lea.sflag [#allocation4], %s219
        %s221 = sand.u32 %s100, 1
        %s222 = smul.addr %s221, 32
        %s223 = scalar_lea.vmem [#allocation7], %s222
        %v224 = vld [vmem:[%s197] sm:$0xf]
        %v225 = vld [vmem:[%s187] sm:$0xff]
        %v226 = vperm.slane %v224, 0
        %v227 = vmul.f32 %v225, %v226
        %228 = vst [vmem:[%s223] sm:$0xff] %v227
        %v229 = vld [vmem:[%s187 + $0x8] sm:$0xff]
        %v230 = vperm.slane %v224, 1
        %v231 = vmul.f32 %v229, %v230
        %232 = vst [vmem:[%s223 + $0x8] sm:$0xff] %v231
        %v233 = vld [vmem:[%s187 + $0x10] sm:$0xff]
        %v234 = vperm.slane %v224, 2
        %v235 = vmul.f32 %v233, %v234
        %236 = vst [vmem:[%s223 + $0x10] sm:$0xff] %v235
        %v237 = vld [vmem:[%s187 + $0x18] sm:$0xff]
        %v238 = vperm.slane %v224, 3
        %v239 = vmul.f32 %v237, %v238
        %240 = vst [vmem:[%s223 + $0x18] sm:$0xff] %v239
        %s241 = sand.u32 %s100, 1
        %s242 = scalar_lea.sflag [#allocation4], %s241
        %s243 = sand.u32 %s100, 1
        %s244 = smul.addr %s243, 32
        %s245 = scalar_lea.vmem [#allocation7], %s244
        // Predicated region
        $region37: #{tpu_custom_call.1} parent=27 // pred_check
          %p246 = pneg %p110
        $region38: #{tpu_custom_call.1} parent=27 // pred_check_branch
          %248 = sbr.rel (%p246) target = $region40
        $region39: #{tpu_custom_call.1} parent=27 // pred_region
          %250 = vsyncadd %s242, 0
          %s251 = smul.addr %s26, 8
          %s252 = sadd.s32 %s27, %s251
          %s253 = smul.addr %s252, 8
          %s254 = scalar_lea.hbm %s2, %s253
          %s255 = sshll.u32 %s245, 4
          %s256 = int_to_ptr.vmem [resolvable:$true] %s255
          %s257 = sshll.u32 %s254, 4
          %s258 = int_to_ptr.hbm [resolvable:$true] %s257
          %263 = dma.vmem_to_hbm [thread:$0]  %s256, 512, %s258, %s242, 128, 256, 8
        $region40: #{tpu_custom_call.1} parent=27 // pred_fallthru
          _
      $region28: #{tpu_custom_call.1} parent=5 // pred_fallthru
        _
      %p264 = scmp.le.s32.totalorder 2, %s17
      // Predicated region
      $region41: #{tpu_custom_call.1} parent=5 // pred_check
        %p265 = pneg %p264
      $region42: #{tpu_custom_call.1} parent=5 // pred_check_branch
        %267 = sbr.rel (%p265) target = $region44
      $region43: #{tpu_custom_call.1} parent=5 // pred_region
        %s268 = ssub.s32 %s17, 2
        // Predicated region
        $region45: #{tpu_custom_call.1} parent=43 // pred_check
          %p269 = pneg %p116
        $region46: #{tpu_custom_call.1} parent=43 // pred_check_branch
          %271 = sbr.rel (%p269) target = $region48
        $region47: #{tpu_custom_call.1} parent=43 // pred_region
          %s272 = sand.u32 %s101, 1
          %s273 = scalar_lea.sflag [#allocation4], %s272
          %s274 = sand.u32 %s101, 1
          %s275 = smul.addr %s274, 32
          %s276 = scalar_lea.vmem [#allocation7], %s275
          %278 = dma.done %s273, 512
        $region48: #{tpu_custom_call.1} parent=43 // pred_fallthru
          _
      $region44: #{tpu_custom_call.1} parent=5 // pred_fallthru
        _
    $region6: #{tpu_custom_call.1} parent=1 // loop_footer
      %s21 = sadd.s32 1, %s17
    $region7: #{tpu_custom_call.1} parent=1 // loop_footer_branch
      %16 = sbr.rel target = $region3
    $region8: #{tpu_custom_call.1} parent=1 // loop_exit
      _
    %279 = vsyncpa [#allocation3], 1
    %s280 = scalar_lea.sflag [#allocation3], 1
    %281 = vsyncpa %s280, 1
    %282 = vsyncpa [#allocation6], 1
    %s283 = scalar_lea.sflag [#allocation6], 1
    %284 = vsyncpa %s283, 1
    %285 = vsyncpa [#allocation4], 1
    %s286 = scalar_lea.sflag [#allocation4], 1
    %287 = vsyncpa %s286, 1

</llo_original>
